<compile_context>
chip_gen: v5e
topology: v5e:2x2
jax: 0.10.0
libtpu: 0.0.40
codegen_flags: <defaults>
</compile_context>

<pallas_src>
import functools

import jax
import jax.numpy as jnp
from jax import lax
from jax.experimental import pallas as pl
from jax.experimental.pallas import tpu as pltpu


def _lstm_recurrence_kernel(pre_ref, whh_ref, wfc_ref, bfc_ref,
                            out_ref, h_ref, c_ref,
                            *, seq_len, linear_loss, mask_tail, unroll):
    """One (batch_block, time_chunk) grid step of the LSTM recurrence.

    pre_ref : (Tc, Bb, 4H)  pre-computed x @ W_ih + b chunk (f32 or bf16)
    whh_ref : (H, 4H)       hidden->gates weights (g cols pre-scaled by 2)
    wfc_ref : (1, H)        fc weight row (f32)
    bfc_ref : (1, 1)        fc bias (f32)
    out_ref : (Bb, 1)       score (written only at the last time chunk)
    h_ref, c_ref : (Bb, H)  f32 VMEM scratch carried across time chunks
    """
    tt = pl.program_id(1)

    @pl.when(tt == 0)
    def _init():
        h_ref[...] = jnp.zeros_like(h_ref)
        c_ref[...] = jnp.zeros_like(c_ref)

    Tc, Bb, G = pre_ref.shape
    H = whh_ref.shape[0]
    cdtype = whh_ref.dtype          # matmul-operand dtype (f32, or bf16 fast path)
    whh = whh_ref[...]              # VMEM-resident (single-buffered)

    def step(t, carry):
        h, c = carry
        gates = (pre_ref[t].astype(jnp.float32)
                 + jnp.dot(h.astype(cdtype), whh,
                           preferred_element_type=jnp.float32))       # (Bb, 4H) f32
        # g-gate columns were pre-scaled by 2 in the wrapper, so one full-width
        # sigmoid covers all four gates: tanh(g) = 2*sigmoid(2g) - 1.
        s = jax.nn.sigmoid(gates)                                     # 1 EUP pass
        i_g = s[:, 0 * H:1 * H]
        f_g = s[:, 1 * H:2 * H]
        g_g = 2.0 * s[:, 2 * H:3 * H] - 1.0                           # VPU fixup
        o_g = s[:, 3 * H:4 * H]
        c_new = f_g * c + i_g * g_g
        h_new = o_g * jnp.tanh(c_new)                                 # 1 EUP pass
        if mask_tail:
            valid = tt * Tc + t < seq_len      # skip zero-padded tail timesteps
            h_new = jnp.where(valid, h_new, h)
            c_new = jnp.where(valid, c_new, c)
        return h_new, c_new

    carry = (h_ref[...], c_ref[...])
    if unroll >= Tc:
        # Small batch blocks: fully unrolled, every slice static.
        for t in range(Tc):
            carry = step(t, carry)
    else:
        # Larger blocks: bounded unroll keeps vreg pressure in check.
        carry = lax.fori_loop(0, Tc, step, carry, unroll=unroll)
    h, c = carry
    h_ref[...] = h
    c_ref[...] = c

    @pl.when(tt == pl.num_programs(1) - 1)
    def _finalize():
        # Linear(H, 1): VPU multiply + lane reduction (skip the MXU for N=1).
        score = jnp.sum(h * wfc_ref[...], axis=-1, keepdims=True) + bfc_ref[...]
        if linear_loss:
            score = 1.0 + jnp.tanh(score)
        out_ref[...] = score.astype(out_ref.dtype)


def _round_up(x, m):
    return (x + m - 1) // m * m


def _tensorcores_per_device():
    """2 for megacore / v7x-style chips, 1 for v5e/v6e-style chips."""
    try:
        kind = jax.devices()[0].device_kind.lower()
    except Exception:
        return 1
    if "lite" in kind or "v5e" in kind or "v6e" in kind or "v6" in kind \
            or "v2" in kind or "v3" in kind:
        return 1
    if "v4" in kind or "v5p" in kind or "v7" in kind or "7x" in kind:
        return 2
    return 1


def _vmem_capacity_bytes():
    try:
        info = pltpu.get_tpu_info()
        cap = getattr(info, "vmem_capacity_bytes", None)
        if cap:
            return int(cap)
    except Exception:
        pass
    return 64 * 1024 * 1024   # conservative (v7x-safe) fallback


def _resident_spec(shape):
    """Constant-index, single-buffered (VMEM-resident) weight BlockSpec."""
    idx = lambda bb, tt, _n=len(shape): (0,) * _n
    try:
        return pl.BlockSpec(shape, idx, pipeline_mode=pl.Buffered(1))
    except TypeError:   # older BlockSpec without pipeline_mode
        return pl.BlockSpec(shape, idx)


def lstm_model_forward(trajectory, params, *, linear_loss=False,
                       time_block=32, batch_block=None,
                       compute_dtype=jnp.float32):
    """trajectory: (B, T, state_dim) float32, batch_first (PyTorch convention).

    Returns score of shape (B, 1), matching LSTMModel.forward (lengths=None).
    compute_dtype=jnp.bfloat16 enables the v6e/v7x fast MXU path (carries and
    gate math stay f32).  batch_block overrides the auto 1-vs-2-TensorCore
    batch split.
    """
    w_ih, w_hh, b_ih, b_hh, w_fc, b_fc = (
        params["w_ih"], params["w_hh"], params["b_ih"],
        params["b_hh"], params["w_fc"], params["b_fc"])

    B, T, D = trajectory.shape
    H = w_hh.shape[1]
    G = 4 * H

    # Weights: transpose to x @ W form, fuse the two biases, and fold a x2 into
    # the g-gate columns so the kernel uses a single full-width sigmoid.
    gate_scale = jnp.concatenate(
        [jnp.ones((1, H), jnp.float32), jnp.ones((1, H), jnp.float32),
         jnp.full((1, H), 2.0, jnp.float32), jnp.ones((1, H), jnp.float32)],
        axis=1)                                                            # (1, 4H)
    wih_t = (w_ih.T.astype(jnp.float32) * gate_scale).astype(compute_dtype)   # (D, 4H)
    whh_t = (w_hh.T.astype(jnp.float32) * gate_scale).astype(compute_dtype)   # (H, 4H)
    b_all = (b_ih + b_hh).reshape(1, G).astype(jnp.float32) * gate_scale      # (1, 4H)
    wfc_row = w_fc.reshape(1, H).astype(jnp.float32)                          # (1, H)
    bfc = b_fc.reshape(1, 1).astype(jnp.float32)                              # (1, 1)

    # ---- batch tiling: split across TensorCores only where there are 2 ----
    B8 = _round_up(B, 8)
    n_cores = _tensorcores_per_device()
    if batch_block is None:
        if n_cores > 1 and B8 >= 8 * n_cores:
            Bb = _round_up(pl.cdiv(B8, n_cores), 8)   # shard "parallel" axis
        else:
            Bb = B8                                   # single block: large M per matmul
    else:
        Bb = _round_up(max(8, min(batch_block, B8)), 8)
    B_pad = _round_up(B8, Bb)

    # ---- time tiling: auto-shrink the chunk to fit this chip's VMEM ----
    stream_dtype = compute_dtype
    stream_bytes = jnp.dtype(stream_dtype).itemsize
    compute_bytes = jnp.dtype(compute_dtype).itemsize
    vmem_cap = _vmem_capacity_bytes()
    weight_bytes = H * G * compute_bytes + H * 4 + 4       # single-buffered
    scratch_bytes = 2 * Bb * H * 4                         # h/c carries
    Tc = max(1, min(time_block, T))
    while Tc > 1 and (2 * Tc * Bb * G * stream_bytes
                      + weight_bytes + scratch_bytes) > vmem_cap // 2:
        Tc = max(1, Tc // 2)
    T_pad = _round_up(T, Tc)
    mask_tail = T_pad != T

    # ---- hoisted input projection: one big XLA matmul (B*T, D) @ (D, 4H) ----
    x2 = trajectory.reshape(B * T, D).astype(compute_dtype)
    pre = jnp.dot(x2, wih_t, preferred_element_type=jnp.float32,
                  precision=jax.lax.Precision.HIGHEST) + b_all            # (B*T, 4H) f32
    pre_tm = jnp.transpose(pre.reshape(B, T, G), (1, 0, 2))               # (T, B, 4H)
    pre_tm = jnp.pad(pre_tm, ((0, T_pad - T), (0, B_pad - B), (0, 0)))
    pre_tm = pre_tm.astype(stream_dtype)                                  # lane-dense stream

    grid = (B_pad // Bb, T_pad // Tc)
    unroll = Tc if Bb <= 32 else 2

    est = (2 * Tc * Bb * G * stream_bytes     # double-buffered pre-gate stream
           + weight_bytes + scratch_bytes + 4 * Bb * 4)
    vmem_limit = int(min(max(32 << 20, 2 * est),
                         max(vmem_cap - (8 << 20), est + (2 << 20))))

    kernel = functools.partial(_lstm_recurrence_kernel, seq_len=T,
                               linear_loss=linear_loss, mask_tail=mask_tail,
                               unroll=unroll)

    out = pl.pallas_call(
        kernel,
        out_shape=jax.ShapeDtypeStruct((B_pad, 1), jnp.float32),
        grid_spec=pltpu.PrefetchScalarGridSpec(
            num_scalar_prefetch=0,
            grid=grid,
            in_specs=[
                # Pre-gate chunk: streamed / double-buffered over time,
                # lane-dense (last dim = 4H, multiple of 128 or full dim).
                pl.BlockSpec((Tc, Bb, G), lambda bb, tt: (tt, bb, 0)),
                # Weights: constant index maps, DMA'd once, single-buffered.
                _resident_spec((H, G)),
                _resident_spec((1, H)),
                _resident_spec((1, 1)),
            ],
            out_specs=pl.BlockSpec((Bb, 1), lambda bb, tt: (bb, 0)),
            scratch_shapes=[
                pltpu.VMEM((Bb, H), jnp.float32),        # h carry
                pltpu.VMEM((Bb, H), jnp.float32),        # c carry
            ],
        ),
        compiler_params=pltpu.CompilerParams(
            dimension_semantics=("parallel", "arbitrary"),
            vmem_limit_bytes=vmem_limit,
        ),
    )(pre_tm, whh_t, wfc_row, bfc)
    return out[:B]


def init_params(key, state_dim, hidden_dim):
    """Deterministic init mimicking PyTorch's U(-1/sqrt(H), 1/sqrt(H))."""
    ks = jax.random.split(key, 6)
    bound = 1.0 / jnp.sqrt(hidden_dim)

    def u(k, shape):
        return jax.random.uniform(k, shape, jnp.float32, -bound, bound)

    return {
        "w_ih": u(ks[0], (4 * hidden_dim, state_dim)),   # torch weight_ih_l0
        "w_hh": u(ks[1], (4 * hidden_dim, hidden_dim)),  # torch weight_hh_l0
        "b_ih": u(ks[2], (4 * hidden_dim,)),
        "b_hh": u(ks[3], (4 * hidden_dim,)),
        "w_fc": u(ks[4], (1, hidden_dim)),               # torch fc.weight
        "b_fc": u(ks[5], (1,)),                          # torch fc.bias
    }


def reference_forward(trajectory, params, *, linear_loss=False):
    """Pure-JAX reference of the PyTorch LSTM forward (for sanity checks)."""
    w_ih, w_hh = params["w_ih"], params["w_hh"]
    b = params["b_ih"] + params["b_hh"]
    B, T, D = trajectory.shape
    H = w_hh.shape[1]
    h = jnp.zeros((B, H), jnp.float32)
    c = jnp.zeros((B, H), jnp.float32)
    for t in range(T):
        gates = trajectory[:, t, :] @ w_ih.T + h @ w_hh.T + b
        i = jax.nn.sigmoid(gates[:, 0 * H:1 * H])
        f = jax.nn.sigmoid(gates[:, 1 * H:2 * H])
        g = jnp.tanh(gates[:, 2 * H:3 * H])
        o = jax.nn.sigmoid(gates[:, 3 * H:4 * H])
        c = f * c + i * g
        h = o * jnp.tanh(c)
    score = h @ params["w_fc"].T + params["b_fc"]
    if linear_loss:
        score = 1.0 + jnp.tanh(score)
    return score


if __name__ == "__main__":
    # Small shapes consistent with the module: obs_dim=12, act_dim=4 -> state_dim=16.
    B, T = 2, 8
    OBS_DIM, ACT_DIM, HIDDEN = 12, 4, 32
    STATE_DIM = OBS_DIM + ACT_DIM

    key = jax.random.PRNGKey(0)
    k_p, k_x, k_x2 = jax.random.split(key, 3)
    params = init_params(k_p, STATE_DIM, HIDDEN)
    trajectory = jax.random.normal(k_x, (B, T, STATE_DIM), jnp.float32)

    ref = reference_forward(trajectory, params)

    # 1) Default f32 path (Bradley-Terry scoring head).
    score = jax.block_until_ready(lstm_model_forward(trajectory, params))
    assert score.shape == (B, 1)
    assert jnp.allclose(score, ref, atol=1e-4, rtol=1e-4), (score, ref)

    # 2) linear_loss head (score -> 1 + tanh(score)).
    score_lin = jax.block_until_ready(
        lstm_model_forward(trajectory, params, linear_loss=True))
    ref_lin = reference_forward(trajectory, params, linear_loss=True)
    assert jnp.allclose(score_lin, ref_lin, atol=1e-4, rtol=1e-4), (score_lin, ref_lin)

    # 3) Multi-chunk time grid + tail masking (T not a multiple of the chunk).
    score_chunked = jax.block_until_ready(
        lstm_model_forward(trajectory, params, time_block=3))
    assert jnp.allclose(score_chunked, ref, atol=1e-4, rtol=1e-4), (score_chunked, ref)

    # 4) bf16 matmul / streaming path (v6e/v7x); carries & gate math stay f32.
    score_bf16 = jax.block_until_ready(
        lstm_model_forward(trajectory, params, compute_dtype=jnp.bfloat16))
    assert jnp.allclose(score_bf16, ref, atol=1e-1, rtol=1e-1), (score_bf16, ref)

    # 5) Larger batch: bounded-unroll fori_loop recurrence + multi-chunk time.
    B2 = 40
    trajectory2 = jax.random.normal(k_x2, (B2, T, STATE_DIM), jnp.float32)
    ref2 = reference_forward(trajectory2, params)
    score_big = jax.block_until_ready(
        lstm_model_forward(trajectory2, params, time_block=4, batch_block=40))
    assert jnp.allclose(score_big, ref2, atol=1e-4, rtol=1e-4), (score_big, ref2)

    # 6) Batch-blocked ("parallel" axis > 1) path with padded batch rows.
    score_bblk = jax.block_until_ready(
        lstm_model_forward(trajectory2, params, batch_block=16))
    assert jnp.allclose(score_bblk, ref2, atol=1e-4, rtol=1e-4), (score_bblk, ref2)

    print("KERNEL_OK")
</pallas_src>

<mosaic_0001>
module attributes {stable_mosaic.version = 11 : i64} {
  func.func @_lstm_recurrence_kernel(%arg0: i32, %arg1: i32, %arg2: memref<8x8x128xf32, #tpu.memory_space<vmem>>, %arg3: memref<32x128xf32, #tpu.memory_space<vmem>>, %arg4: memref<1x32xf32, #tpu.memory_space<vmem>>, %arg5: memref<1x1xf32, #tpu.memory_space<vmem>>, %arg6: memref<8x1xf32, #tpu.memory_space<vmem>>, %arg7: memref<8x32xf32, #tpu.memory_space<vmem>>, %arg8: memref<8x32xf32, #tpu.memory_space<vmem>>) attributes {dimension_semantics = [#tpu.dimension_semantics<parallel>, #tpu.dimension_semantics<arbitrary>], iteration_bounds = array<i64: 1, 1>, scalar_prefetch = 0 : i64, scratch_operands = 2 : i64, tpu.core_type = #tpu.core_type<tc>, window_params = [{transform_indices = @transform_0, window_bounds = array<i64: 8, 8, 128>}, {pipeline_mode = #tpu.pipeline_mode<synchronous>, transform_indices = @transform_1, window_bounds = array<i64: 32, 128>}, {pipeline_mode = #tpu.pipeline_mode<synchronous>, transform_indices = @transform_2, window_bounds = array<i64: 1, 32>}, {pipeline_mode = #tpu.pipeline_mode<synchronous>, transform_indices = @transform_3, window_bounds = array<i64: 1, 1>}, {transform_indices = @transform_4, window_bounds = array<i64: 8, 1>}]} {
    %c0_i32 = arith.constant 0 : i32
    %0 = arith.cmpi eq, %arg1, %c0_i32 : i32
    %1 = arith.extui %0 : i1 to i32
    %c0_i32_0 = arith.constant 0 : i32
    %2 = arith.cmpi ne, %1, %c0_i32_0 : i32
    scf.if %2 {
      %cst_60 = arith.constant 0.000000e+00 : f32
      %187 = vector.broadcast %cst_60 : f32 to vector<8x32xf32>
      %c0_61 = arith.constant 0 : index
      %c0_62 = arith.constant 0 : index
      %188 = vector.load %arg7[%c0_61, %c0_62] : memref<8x32xf32, #tpu.memory_space<vmem>>, vector<8x32xf32>
      tpu.vector_store %arg7[%c0_61, %c0_62], %187 {strides = array<i32>} : memref<8x32xf32, #tpu.memory_space<vmem>>, vector<8x32xf32>,
      %cst_63 = arith.constant 0.000000e+00 : f32
      %189 = vector.broadcast %cst_63 : f32 to vector<8x32xf32>
      %c0_64 = arith.constant 0 : index
      %c0_65 = arith.constant 0 : index
      %190 = vector.load %arg8[%c0_64, %c0_65] : memref<8x32xf32, #tpu.memory_space<vmem>>, vector<8x32xf32>
      tpu.vector_store %arg8[%c0_64, %c0_65], %189 {strides = array<i32>} : memref<8x32xf32, #tpu.memory_space<vmem>>, vector<8x32xf32>,
    } else {
    }
    %c0 = arith.constant 0 : index
    %c0_1 = arith.constant 0 : index
    %3 = vector.load %arg3[%c0, %c0_1] : memref<32x128xf32, #tpu.memory_space<vmem>>, vector<32x128xf32>
    %c0_2 = arith.constant 0 : index
    %c0_3 = arith.constant 0 : index
    %4 = vector.load %arg7[%c0_2, %c0_3] : memref<8x32xf32, #tpu.memory_space<vmem>>, vector<8x32xf32>
    %c0_4 = arith.constant 0 : index
    %c0_5 = arith.constant 0 : index
    %5 = vector.load %arg8[%c0_4, %c0_5] : memref<8x32xf32, #tpu.memory_space<vmem>>, vector<8x32xf32>
    %c0_6 = arith.constant 0 : index
    %c0_7 = arith.constant 0 : index
    %c0_8 = arith.constant 0 : index
    %6 = vector.load %arg2[%c0_6, %c0_7, %c0_8] : memref<8x8x128xf32, #tpu.memory_space<vmem>>, vector<1x8x128xf32>
    %7 = vector.shape_cast %6 : vector<1x8x128xf32> to vector<8x128xf32>
    %cst = arith.constant dense<0.000000e+00> : vector<8x128xf32>
    %8 = tpu.matmul %4, %3, %cst {dimension_numbers = #tpu.dot_dimension_numbers<[1], [0], [0], [1], [0, 0, 1, 1], [], []>} : vector<8x32xf32>, vector<32x128xf32>, vector<8x128xf32> -> vector<8x128xf32>
    %9 = arith.addf %7, %8 : vector<8x128xf32>
    %10 = arith.negf %9 : vector<8x128xf32>
    %11 = math.exp %10 : vector<8x128xf32>
    %cst_9 = arith.constant 1.000000e+00 : f32
    %12 = vector.broadcast %cst_9 : f32 to vector<8x128xf32>
    %13 = arith.addf %12, %11 : vector<8x128xf32>
    %14 = arith.divf %12, %13 : vector<8x128xf32>
    %15 = vector.extract_strided_slice %14 {offsets = [0, 0], sizes = [8, 32], strides = [1, 1]} : vector<8x128xf32> to vector<8x32xf32>
    %16 = vector.extract_strided_slice %14 {offsets = [0, 32], sizes = [8, 32], strides = [1, 1]} : vector<8x128xf32> to vector<8x32xf32>
    %17 = vector.extract_strided_slice %14 {offsets = [0, 64], sizes = [8, 32], strides = [1, 1]} : vector<8x128xf32> to vector<8x32xf32>
    %cst_10 = arith.constant 2.000000e+00 : f32
    %18 = vector.broadcast %cst_10 : f32 to vector<8x32xf32>
    %19 = arith.mulf %18, %17 : vector<8x32xf32>
    %cst_11 = arith.constant 1.000000e+00 : f32
    %20 = vector.broadcast %cst_11 : f32 to vector<8x32xf32>
    %21 = arith.subf %19, %20 : vector<8x32xf32>
    %22 = vector.extract_strided_slice %14 {offsets = [0, 96], sizes = [8, 32], strides = [1, 1]} : vector<8x128xf32> to vector<8x32xf32>
    %23 = arith.mulf %16, %5 : vector<8x32xf32>
    %24 = arith.mulf %15, %21 : vector<8x32xf32>
    %25 = arith.addf %23, %24 : vector<8x32xf32>
    %26 = math.tanh %25 : vector<8x32xf32>
    %27 = arith.mulf %22, %26 : vector<8x32xf32>
    %c1 = arith.constant 1 : index
    %c0_12 = arith.constant 0 : index
    %c0_13 = arith.constant 0 : index
    %28 = vector.load %arg2[%c1, %c0_12, %c0_13] : memref<8x8x128xf32, #tpu.memory_space<vmem>>, vector<1x8x128xf32>
    %29 = vector.shape_cast %28 : vector<1x8x128xf32> to vector<8x128xf32>
    %cst_14 = arith.constant dense<0.000000e+00> : vector<8x128xf32>
    %30 = tpu.matmul %27, %3, %cst_14 {dimension_numbers = #tpu.dot_dimension_numbers<[1], [0], [0], [1], [0, 0, 1, 1], [], []>} : vector<8x32xf32>, vector<32x128xf32>, vector<8x128xf32> -> vector<8x128xf32>
    %31 = arith.addf %29, %30 : vector<8x128xf32>
    %32 = arith.negf %31 : vector<8x128xf32>
    %33 = math.exp %32 : vector<8x128xf32>
    %cst_15 = arith.constant 1.000000e+00 : f32
    %34 = vector.broadcast %cst_15 : f32 to vector<8x128xf32>
    %35 = arith.addf %34, %33 : vector<8x128xf32>
    %36 = arith.divf %34, %35 : vector<8x128xf32>
    %37 = vector.extract_strided_slice %36 {offsets = [0, 0], sizes = [8, 32], strides = [1, 1]} : vector<8x128xf32> to vector<8x32xf32>
    %38 = vector.extract_strided_slice %36 {offsets = [0, 32], sizes = [8, 32], strides = [1, 1]} : vector<8x128xf32> to vector<8x32xf32>
    %39 = vector.extract_strided_slice %36 {offsets = [0, 64], sizes = [8, 32], strides = [1, 1]} : vector<8x128xf32> to vector<8x32xf32>
    %cst_16 = arith.constant 2.000000e+00 : f32
    %40 = vector.broadcast %cst_16 : f32 to vector<8x32xf32>
    %41 = arith.mulf %40, %39 : vector<8x32xf32>
    %cst_17 = arith.constant 1.000000e+00 : f32
    %42 = vector.broadcast %cst_17 : f32 to vector<8x32xf32>
    %43 = arith.subf %41, %42 : vector<8x32xf32>
    %44 = vector.extract_strided_slice %36 {offsets = [0, 96], sizes = [8, 32], strides = [1, 1]} : vector<8x128xf32> to vector<8x32xf32>
    %45 = arith.mulf %38, %25 : vector<8x32xf32>
    %46 = arith.mulf %37, %43 : vector<8x32xf32>
    %47 = arith.addf %45, %46 : vector<8x32xf32>
    %48 = math.tanh %47 : vector<8x32xf32>
    %49 = arith.mulf %44, %48 : vector<8x32xf32>
    %c2 = arith.constant 2 : index
    %c0_18 = arith.constant 0 : index
    %c0_19 = arith.constant 0 : index
    %50 = vector.load %arg2[%c2, %c0_18, %c0_19] : memref<8x8x128xf32, #tpu.memory_space<vmem>>, vector<1x8x128xf32>
    %51 = vector.shape_cast %50 : vector<1x8x128xf32> to vector<8x128xf32>
    %cst_20 = arith.constant dense<0.000000e+00> : vector<8x128xf32>
    %52 = tpu.matmul %49, %3, %cst_20 {dimension_numbers = #tpu.dot_dimension_numbers<[1], [0], [0], [1], [0, 0, 1, 1], [], []>} : vector<8x32xf32>, vector<32x128xf32>, vector<8x128xf32> -> vector<8x128xf32>
    %53 = arith.addf %51, %52 : vector<8x128xf32>
    %54 = arith.negf %53 : vector<8x128xf32>
    %55 = math.exp %54 : vector<8x128xf32>
    %cst_21 = arith.constant 1.000000e+00 : f32
    %56 = vector.broadcast %cst_21 : f32 to vector<8x128xf32>
    %57 = arith.addf %56, %55 : vector<8x128xf32>
    %58 = arith.divf %56, %57 : vector<8x128xf32>
    %59 = vector.extract_strided_slice %58 {offsets = [0, 0], sizes = [8, 32], strides = [1, 1]} : vector<8x128xf32> to vector<8x32xf32>
    %60 = vector.extract_strided_slice %58 {offsets = [0, 32], sizes = [8, 32], strides = [1, 1]} : vector<8x128xf32> to vector<8x32xf32>
    %61 = vector.extract_strided_slice %58 {offsets = [0, 64], sizes = [8, 32], strides = [1, 1]} : vector<8x128xf32> to vector<8x32xf32>
    %cst_22 = arith.constant 2.000000e+00 : f32
    %62 = vector.broadcast %cst_22 : f32 to vector<8x32xf32>
    %63 = arith.mulf %62, %61 : vector<8x32xf32>
    %cst_23 = arith.constant 1.000000e+00 : f32
    %64 = vector.broadcast %cst_23 : f32 to vector<8x32xf32>
    %65 = arith.subf %63, %64 : vector<8x32xf32>
    %66 = vector.extract_strided_slice %58 {offsets = [0, 96], sizes = [8, 32], strides = [1, 1]} : vector<8x128xf32> to vector<8x32xf32>
    %67 = arith.mulf %60, %47 : vector<8x32xf32>
    %68 = arith.mulf %59, %65 : vector<8x32xf32>
    %69 = arith.addf %67, %68 : vector<8x32xf32>
    %70 = math.tanh %69 : vector<8x32xf32>
    %71 = arith.mulf %66, %70 : vector<8x32xf32>
    %c3 = arith.constant 3 : index
    %c0_24 = arith.constant 0 : index
    %c0_25 = arith.constant 0 : index
    %72 = vector.load %arg2[%c3, %c0_24, %c0_25] : memref<8x8x128xf32, #tpu.memory_space<vmem>>, vector<1x8x128xf32>
    %73 = vector.shape_cast %72 : vector<1x8x128xf32> to vector<8x128xf32>
    %cst_26 = arith.constant dense<0.000000e+00> : vector<8x128xf32>
    %74 = tpu.matmul %71, %3, %cst_26 {dimension_numbers = #tpu.dot_dimension_numbers<[1], [0], [0], [1], [0, 0, 1, 1], [], []>} : vector<8x32xf32>, vector<32x128xf32>, vector<8x128xf32> -> vector<8x128xf32>
    %75 = arith.addf %73, %74 : vector<8x128xf32>
    %76 = arith.negf %75 : vector<8x128xf32>
    %77 = math.exp %76 : vector<8x128xf32>
    %cst_27 = arith.constant 1.000000e+00 : f32
    %78 = vector.broadcast %cst_27 : f32 to vector<8x128xf32>
    %79 = arith.addf %78, %77 : vector<8x128xf32>
    %80 = arith.divf %78, %79 : vector<8x128xf32>
    %81 = vector.extract_strided_slice %80 {offsets = [0, 0], sizes = [8, 32], strides = [1, 1]} : vector<8x128xf32> to vector<8x32xf32>
    %82 = vector.extract_strided_slice %80 {offsets = [0, 32], sizes = [8, 32], strides = [1, 1]} : vector<8x128xf32> to vector<8x32xf32>
    %83 = vector.extract_strided_slice %80 {offsets = [0, 64], sizes = [8, 32], strides = [1, 1]} : vector<8x128xf32> to vector<8x32xf32>
    %cst_28 = arith.constant 2.000000e+00 : f32
    %84 = vector.broadcast %cst_28 : f32 to vector<8x32xf32>
    %85 = arith.mulf %84, %83 : vector<8x32xf32>
    %cst_29 = arith.constant 1.000000e+00 : f32
    %86 = vector.broadcast %cst_29 : f32 to vector<8x32xf32>
    %87 = arith.subf %85, %86 : vector<8x32xf32>
    %88 = vector.extract_strided_slice %80 {offsets = [0, 96], sizes = [8, 32], strides = [1, 1]} : vector<8x128xf32> to vector<8x32xf32>
    %89 = arith.mulf %82, %69 : vector<8x32xf32>
    %90 = arith.mulf %81, %87 : vector<8x32xf32>
    %91 = arith.addf %89, %90 : vector<8x32xf32>
    %92 = math.tanh %91 : vector<8x32xf32>
    %93 = arith.mulf %88, %92 : vector<8x32xf32>
    %c4 = arith.constant 4 : index
    %c0_30 = arith.constant 0 : index
    %c0_31 = arith.constant 0 : index
    %94 = vector.load %arg2[%c4, %c0_30, %c0_31] : memref<8x8x128xf32, #tpu.memory_space<vmem>>, vector<1x8x128xf32>
    %95 = vector.shape_cast %94 : vector<1x8x128xf32> to vector<8x128xf32>
    %cst_32 = arith.constant dense<0.000000e+00> : vector<8x128xf32>
    %96 = tpu.matmul %93, %3, %cst_32 {dimension_numbers = #tpu.dot_dimension_numbers<[1], [0], [0], [1], [0, 0, 1, 1], [], []>} : vector<8x32xf32>, vector<32x128xf32>, vector<8x128xf32> -> vector<8x128xf32>
    %97 = arith.addf %95, %96 : vector<8x128xf32>
    %98 = arith.negf %97 : vector<8x128xf32>
    %99 = math.exp %98 : vector<8x128xf32>
    %cst_33 = arith.constant 1.000000e+00 : f32
    %100 = vector.broadcast %cst_33 : f32 to vector<8x128xf32>
    %101 = arith.addf %100, %99 : vector<8x128xf32>
    %102 = arith.divf %100, %101 : vector<8x128xf32>
    %103 = vector.extract_strided_slice %102 {offsets = [0, 0], sizes = [8, 32], strides = [1, 1]} : vector<8x128xf32> to vector<8x32xf32>
    %104 = vector.extract_strided_slice %102 {offsets = [0, 32], sizes = [8, 32], strides = [1, 1]} : vector<8x128xf32> to vector<8x32xf32>
    %105 = vector.extract_strided_slice %102 {offsets = [0, 64], sizes = [8, 32], strides = [1, 1]} : vector<8x128xf32> to vector<8x32xf32>
    %cst_34 = arith.constant 2.000000e+00 : f32
    %106 = vector.broadcast %cst_34 : f32 to vector<8x32xf32>
    %107 = arith.mulf %106, %105 : vector<8x32xf32>
    %cst_35 = arith.constant 1.000000e+00 : f32
    %108 = vector.broadcast %cst_35 : f32 to vector<8x32xf32>
    %109 = arith.subf %107, %108 : vector<8x32xf32>
    %110 = vector.extract_strided_slice %102 {offsets = [0, 96], sizes = [8, 32], strides = [1, 1]} : vector<8x128xf32> to vector<8x32xf32>
    %111 = arith.mulf %104, %91 : vector<8x32xf32>
    %112 = arith.mulf %103, %109 : vector<8x32xf32>
    %113 = arith.addf %111, %112 : vector<8x32xf32>
    %114 = math.tanh %113 : vector<8x32xf32>
    %115 = arith.mulf %110, %114 : vector<8x32xf32>
    %c5 = arith.constant 5 : index
    %c0_36 = arith.constant 0 : index
    %c0_37 = arith.constant 0 : index
    %116 = vector.load %arg2[%c5, %c0_36, %c0_37] : memref<8x8x128xf32, #tpu.memory_space<vmem>>, vector<1x8x128xf32>
    %117 = vector.shape_cast %116 : vector<1x8x128xf32> to vector<8x128xf32>
    %cst_38 = arith.constant dense<0.000000e+00> : vector<8x128xf32>
    %118 = tpu.matmul %115, %3, %cst_38 {dimension_numbers = #tpu.dot_dimension_numbers<[1], [0], [0], [1], [0, 0, 1, 1], [], []>} : vector<8x32xf32>, vector<32x128xf32>, vector<8x128xf32> -> vector<8x128xf32>
    %119 = arith.addf %117, %118 : vector<8x128xf32>
    %120 = arith.negf %119 : vector<8x128xf32>
    %121 = math.exp %120 : vector<8x128xf32>
    %cst_39 = arith.constant 1.000000e+00 : f32
    %122 = vector.broadcast %cst_39 : f32 to vector<8x128xf32>
    %123 = arith.addf %122, %121 : vector<8x128xf32>
    %124 = arith.divf %122, %123 : vector<8x128xf32>
    %125 = vector.extract_strided_slice %124 {offsets = [0, 0], sizes = [8, 32], strides = [1, 1]} : vector<8x128xf32> to vector<8x32xf32>
    %126 = vector.extract_strided_slice %124 {offsets = [0, 32], sizes = [8, 32], strides = [1, 1]} : vector<8x128xf32> to vector<8x32xf32>
    %127 = vector.extract_strided_slice %124 {offsets = [0, 64], sizes = [8, 32], strides = [1, 1]} : vector<8x128xf32> to vector<8x32xf32>
    %cst_40 = arith.constant 2.000000e+00 : f32
    %128 = vector.broadcast %cst_40 : f32 to vector<8x32xf32>
    %129 = arith.mulf %128, %127 : vector<8x32xf32>
    %cst_41 = arith.constant 1.000000e+00 : f32
    %130 = vector.broadcast %cst_41 : f32 to vector<8x32xf32>
    %131 = arith.subf %129, %130 : vector<8x32xf32>
    %132 = vector.extract_strided_slice %124 {offsets = [0, 96], sizes = [8, 32], strides = [1, 1]} : vector<8x128xf32> to vector<8x32xf32>
    %133 = arith.mulf %126, %113 : vector<8x32xf32>
    %134 = arith.mulf %125, %131 : vector<8x32xf32>
    %135 = arith.addf %133, %134 : vector<8x32xf32>
    %136 = math.tanh %135 : vector<8x32xf32>
    %137 = arith.mulf %132, %136 : vector<8x32xf32>
    %c6 = arith.constant 6 : index
    %c0_42 = arith.constant 0 : index
    %c0_43 = arith.constant 0 : index
    %138 = vector.load %arg2[%c6, %c0_42, %c0_43] : memref<8x8x128xf32, #tpu.memory_space<vmem>>, vector<1x8x128xf32>
    %139 = vector.shape_cast %138 : vector<1x8x128xf32> to vector<8x128xf32>
    %cst_44 = arith.constant dense<0.000000e+00> : vector<8x128xf32>
    %140 = tpu.matmul %137, %3, %cst_44 {dimension_numbers = #tpu.dot_dimension_numbers<[1], [0], [0], [1], [0, 0, 1, 1], [], []>} : vector<8x32xf32>, vector<32x128xf32>, vector<8x128xf32> -> vector<8x128xf32>
    %141 = arith.addf %139, %140 : vector<8x128xf32>
    %142 = arith.negf %141 : vector<8x128xf32>
    %143 = math.exp %142 : vector<8x128xf32>
    %cst_45 = arith.constant 1.000000e+00 : f32
    %144 = vector.broadcast %cst_45 : f32 to vector<8x128xf32>
    %145 = arith.addf %144, %143 : vector<8x128xf32>
    %146 = arith.divf %144, %145 : vector<8x128xf32>
    %147 = vector.extract_strided_slice %146 {offsets = [0, 0], sizes = [8, 32], strides = [1, 1]} : vector<8x128xf32> to vector<8x32xf32>
    %148 = vector.extract_strided_slice %146 {offsets = [0, 32], sizes = [8, 32], strides = [1, 1]} : vector<8x128xf32> to vector<8x32xf32>
    %149 = vector.extract_strided_slice %146 {offsets = [0, 64], sizes = [8, 32], strides = [1, 1]} : vector<8x128xf32> to vector<8x32xf32>
    %cst_46 = arith.constant 2.000000e+00 : f32
    %150 = vector.broadcast %cst_46 : f32 to vector<8x32xf32>
    %151 = arith.mulf %150, %149 : vector<8x32xf32>
    %cst_47 = arith.constant 1.000000e+00 : f32
    %152 = vector.broadcast %cst_47 : f32 to vector<8x32xf32>
    %153 = arith.subf %151, %152 : vector<8x32xf32>
    %154 = vector.extract_strided_slice %146 {offsets = [0, 96], sizes = [8, 32], strides = [1, 1]} : vector<8x128xf32> to vector<8x32xf32>
    %155 = arith.mulf %148, %135 : vector<8x32xf32>
    %156 = arith.mulf %147, %153 : vector<8x32xf32>
    %157 = arith.addf %155, %156 : vector<8x32xf32>
    %158 = math.tanh %157 : vector<8x32xf32>
    %159 = arith.mulf %154, %158 : vector<8x32xf32>
    %c7 = arith.constant 7 : index
    %c0_48 = arith.constant 0 : index
    %c0_49 = arith.constant 0 : index
    %160 = vector.load %arg2[%c7, %c0_48, %c0_49] : memref<8x8x128xf32, #tpu.memory_space<vmem>>, vector<1x8x128xf32>
    %161 = vector.shape_cast %160 : vector<1x8x128xf32> to vector<8x128xf32>
    %cst_50 = arith.constant dense<0.000000e+00> : vector<8x128xf32>
    %162 = tpu.matmul %159, %3, %cst_50 {dimension_numbers = #tpu.dot_dimension_numbers<[1], [0], [0], [1], [0, 0, 1, 1], [], []>} : vector<8x32xf32>, vector<32x128xf32>, vector<8x128xf32> -> vector<8x128xf32>
    %163 = arith.addf %161, %162 : vector<8x128xf32>
    %164 = arith.negf %163 : vector<8x128xf32>
    %165 = math.exp %164 : vector<8x128xf32>
    %cst_51 = arith.constant 1.000000e+00 : f32
    %166 = vector.broadcast %cst_51 : f32 to vector<8x128xf32>
    %167 = arith.addf %166, %165 : vector<8x128xf32>
    %168 = arith.divf %166, %167 : vector<8x128xf32>
    %169 = vector.extract_strided_slice %168 {offsets = [0, 0], sizes = [8, 32], strides = [1, 1]} : vector<8x128xf32> to vector<8x32xf32>
    %170 = vector.extract_strided_slice %168 {offsets = [0, 32], sizes = [8, 32], strides = [1, 1]} : vector<8x128xf32> to vector<8x32xf32>
    %171 = vector.extract_strided_slice %168 {offsets = [0, 64], sizes = [8, 32], strides = [1, 1]} : vector<8x128xf32> to vector<8x32xf32>
    %cst_52 = arith.constant 2.000000e+00 : f32
    %172 = vector.broadcast %cst_52 : f32 to vector<8x32xf32>
    %173 = arith.mulf %172, %171 : vector<8x32xf32>
    %cst_53 = arith.constant 1.000000e+00 : f32
    %174 = vector.broadcast %cst_53 : f32 to vector<8x32xf32>
    %175 = arith.subf %173, %174 : vector<8x32xf32>
    %176 = vector.extract_strided_slice %168 {offsets = [0, 96], sizes = [8, 32], strides = [1, 1]} : vector<8x128xf32> to vector<8x32xf32>
    %177 = arith.mulf %170, %157 : vector<8x32xf32>
    %178 = arith.mulf %169, %175 : vector<8x32xf32>
    %179 = arith.addf %177, %178 : vector<8x32xf32>
    %180 = math.tanh %179 : vector<8x32xf32>
    %181 = arith.mulf %176, %180 : vector<8x32xf32>
    %c0_54 = arith.constant 0 : index
    %c0_55 = arith.constant 0 : index
    %182 = vector.load %arg7[%c0_54, %c0_55] : memref<8x32xf32, #tpu.memory_space<vmem>>, vector<8x32xf32>
    tpu.vector_store %arg7[%c0_54, %c0_55], %181 {strides = array<i32>} : memref<8x32xf32, #tpu.memory_space<vmem>>, vector<8x32xf32>,
    %c0_56 = arith.constant 0 : index
    %c0_57 = arith.constant 0 : index
    %183 = vector.load %arg8[%c0_56, %c0_57] : memref<8x32xf32, #tpu.memory_space<vmem>>, vector<8x32xf32>
    tpu.vector_store %arg8[%c0_56, %c0_57], %179 {strides = array<i32>} : memref<8x32xf32, #tpu.memory_space<vmem>>, vector<8x32xf32>,
    %c0_i32_58 = arith.constant 0 : i32
    %184 = arith.cmpi eq, %arg1, %c0_i32_58 : i32
    %185 = arith.extui %184 : i1 to i32
    %c0_i32_59 = arith.constant 0 : i32
    %186 = arith.cmpi ne, %185, %c0_i32_59 : i32
    scf.if %186 {
      %c0_60 = arith.constant 0 : index
      %c0_61 = arith.constant 0 : index
      %187 = vector.load %arg4[%c0_60, %c0_61] : memref<1x32xf32, #tpu.memory_space<vmem>>, vector<1x32xf32>
      %188 = vector.broadcast %187 : vector<1x32xf32> to vector<8x32xf32>
      %189 = arith.mulf %181, %188 : vector<8x32xf32>
      %cst_62 = arith.constant dense<0.000000e+00> : vector<8xf32>
      %190 = vector.multi_reduction <add>, %189, %cst_62 [1] : vector<8x32xf32> to vector<8xf32>
      %191 = vector.shape_cast %190 : vector<8xf32> to vector<8x1xf32>
      %c0_63 = arith.constant 0 : index
      %c0_64 = arith.constant 0 : index
      %192 = vector.load %arg5[%c0_63, %c0_64] : memref<1x1xf32, #tpu.memory_space<vmem>>, vector<1x1xf32>
      %193 = vector.broadcast %192 : vector<1x1xf32> to vector<8x1xf32>
      %194 = arith.addf %191, %193 : vector<8x1xf32>
      %c0_65 = arith.constant 0 : index
      %c0_66 = arith.constant 0 : index
      %195 = vector.load %arg6[%c0_65, %c0_66] : memref<8x1xf32, #tpu.memory_space<vmem>>, vector<8x1xf32>
      tpu.vector_store %arg6[%c0_65, %c0_66], %194 {strides = array<i32>} : memref<8x1xf32, #tpu.memory_space<vmem>>, vector<8x1xf32>,
    } else {
    }
    return
  }
  func.func @transform_0(%arg0: i32, %arg1: i32) -> (i32, i32, i32) {
    %c0_i32 = arith.constant 0 : i32
    %c0_i32_0 = arith.constant 0 : i32
    return %arg1, %arg0, %c0_i32 : i32, i32, i32
  }
  func.func @transform_1(%arg0: i32, %arg1: i32) -> (i32, i32) {
    %c0_i32 = arith.constant 0 : i32
    %c0_i32_0 = arith.constant 0 : i32
    %c0_i32_1 = arith.constant 0 : i32
    return %c0_i32, %c0_i32_0 : i32, i32
  }
  func.func @transform_2(%arg0: i32, %arg1: i32) -> (i32, i32) {
    %c0_i32 = arith.constant 0 : i32
    %c0_i32_0 = arith.constant 0 : i32
    %c0_i32_1 = arith.constant 0 : i32
    return %c0_i32, %c0_i32_0 : i32, i32
  }
  func.func @transform_3(%arg0: i32, %arg1: i32) -> (i32, i32) {
    %c0_i32 = arith.constant 0 : i32
    %c0_i32_0 = arith.constant 0 : i32
    %c0_i32_1 = arith.constant 0 : i32
    return %c0_i32, %c0_i32_0 : i32, i32
  }
  func.func @transform_4(%arg0: i32, %arg1: i32) -> (i32, i32) {
    %c0_i32 = arith.constant 0 : i32
    %c0_i32_0 = arith.constant 0 : i32
    return %arg0, %c0_i32 : i32, i32
  }
}

</mosaic_0001>

<llo_original>
// kernel: tpu_custom_call.1
$region0: #{tpu_custom_call.1}
  #allocation0 [shape = 'u32[]', space=smem, size = 0x4, offset = 0x4, fixed_abs, tag = 'smem constant byte address 0x4 - core index']
  #allocation1 [shape = 'u32[72,128]{1,0:T(1,128)}', space=vmem, size = 0x9000, scoped, tag = 'internal scratch']
  #allocation2 [shape = 'f32[8,32]{1,0:T(8,128)}', space=vmem, size = 0x1000, scoped, tag = 'scratch operand']
  #allocation3 [shape = 'f32[8,32]{1,0:T(8,128)}', space=vmem, size = 0x1000, scoped, tag = 'scratch operand']
  #allocation4 [shape = 'f32[1,1]{1,0:T(1,128)S(1)}', space=vmem, size = 0x200, scoped, tag = 'scoped memory for tpu_custom_call.1']
  %s0 = inlined_call_operand.hbm [shape: f32[8,8,128], index: 0, kind: input, shape index: {}]
  %s1 = inlined_call_operand.hbm [shape: f32[32,128], index: 1, kind: input, shape index: {}]
  %s2 = inlined_call_operand.vmem [shape: f32[1,32], index: 2, kind: input, shape index: {}]
  %s3 = inlined_call_operand.<no memory space> [shape: f32[1,1], index: 3, kind: input, shape index: {}]
  %s4 = inlined_call_operand.vmem [shape: f32[8,1], index: 4, kind: output, shape index: {}]
  %s5 = sld [smem:[#allocation0]]
  $region42: #{tpu_custom_call.1} parent=0
    _
  %s7 = ssub.s32 1, %s5
  %s8 = scalar_select 0, %s7, %s5
  %v9 = vstv %s3
  %10 = vst [vmem:[#allocation4] sm:$0x1] %v9
  $region1: #{tpu_custom_call.1} parent=0
    #allocation5 [shape = 'u8[32768]{0}', space=vmem, size = 0x8000, scoped, tag = 'input window, operand 0, single buffered']
    #allocation6 [shape = 's32[1]{0}', space=sflag, size = 0x4, scoped, tag = 'scoped memory for tpu_custom_call.1']
    #allocation7 [shape = 'u8[16384]{0}', space=vmem, size = 0x4000, scoped, tag = 'input window, operand 1, single buffered']
    #allocation8 [shape = 's32[1]{0}', space=sflag, size = 0x4, scoped, tag = 'scoped memory for tpu_custom_call.1']
    %11 = vsyncpa [#allocation6], 0
    %12 = vsyncpa [#allocation8], 0
    // Predicated region
    $region2: #{tpu_custom_call.1} parent=1 // pred_check
      _
    $region3: #{tpu_custom_call.1} parent=1 // pred_check_branch
      %14 = sbr.rel (0) target = $region5
    $region4: #{tpu_custom_call.1} parent=1 // pred_region
      %16 = vsyncadd [#allocation6], 0
      %s17 = sshll.u32 %s0, 4
      %s18 = int_to_ptr.hbm [resolvable:$true] %s17
      %s19 = sshll.u32 [#allocation5], 4
      %s20 = int_to_ptr.vmem [resolvable:$true] %s19
      %25 = dma.hbm_to_vmem [thread:$0]  %s18, 1024, %s20, [#allocation6], 128, 128, 8
    $region5: #{tpu_custom_call.1} parent=1 // pred_fallthru
      _
    // Predicated region
    $region6: #{tpu_custom_call.1} parent=1 // pred_check
      _
    $region7: #{tpu_custom_call.1} parent=1 // pred_check_branch
      %27 = sbr.rel (0) target = $region9
    $region8: #{tpu_custom_call.1} parent=1 // pred_region
      %29 = vsyncadd [#allocation8], 0
      %s30 = sshll.u32 %s1, 4
      %s31 = int_to_ptr.hbm [resolvable:$true] %s30
      %s32 = sshll.u32 [#allocation7], 4
      %s33 = int_to_ptr.vmem [resolvable:$true] %s32
      %38 = dma.hbm_to_vmem [thread:$0]  %s31, 512, %s33, [#allocation8], 128, 128, 8
    $region9: #{tpu_custom_call.1} parent=1 // pred_fallthru
      _
    // Predicated region
    $region10: #{tpu_custom_call.1} parent=1 // pred_check
      _
    $region11: #{tpu_custom_call.1} parent=1 // pred_check_branch
      %40 = sbr.rel (0) target = $region13
    $region12: #{tpu_custom_call.1} parent=1 // pred_region
      _
    $region13: #{tpu_custom_call.1} parent=1 // pred_fallthru
      _
    // Predicated region
    $region14: #{tpu_custom_call.1} parent=1 // pred_check
      _
    $region15: #{tpu_custom_call.1} parent=1 // pred_check_branch
      %42 = sbr.rel (0) target = $region17
    $region16: #{tpu_custom_call.1} parent=1 // pred_region
      _
    $region17: #{tpu_custom_call.1} parent=1 // pred_fallthru
      _
    // Predicated region
    $region18: #{tpu_custom_call.1} parent=1 // pred_check
      _
    $region19: #{tpu_custom_call.1} parent=1 // pred_check_branch
      %44 = sbr.rel (0) target = $region21
    $region20: #{tpu_custom_call.1} parent=1 // pred_region
      %46 = dma.done [#allocation6], 1024
    $region21: #{tpu_custom_call.1} parent=1 // pred_fallthru
      _
    // Predicated region
    $region22: #{tpu_custom_call.1} parent=1 // pred_check
      _
    $region23: #{tpu_custom_call.1} parent=1 // pred_check_branch
      %48 = sbr.rel (0) target = $region25
    $region24: #{tpu_custom_call.1} parent=1 // pred_region
      %50 = dma.done [#allocation8], 512
    $region25: #{tpu_custom_call.1} parent=1 // pred_fallthru
      _
    %p51 = scmp.eq.s32.totalorder 0, 0
    // Predicated region
    $region26: #{tpu_custom_call.1} parent=1 // pred_check
      %p52 = pneg %p51
    $region27: #{tpu_custom_call.1} parent=1 // pred_check_branch
      %54 = sbr.rel (%p52) target = $region29
    $region28: #{tpu_custom_call.1} parent=1 // pred_region
      %vm55 = vcmask 261120
      %56 = vst.msk [vmem:[#allocation2] sm:$0xff] %vm55, 0.0
      %57 = vst.msk [vmem:[#allocation3] sm:$0xff] %vm55, 0.0
    $region29: #{tpu_custom_call.1} parent=1 // pred_fallthru
      _
    %v58 = vld [vmem:[#allocation7] sm:$0xff]
    %v59 = vld [vmem:[#allocation7 + $0x8] sm:$0xff]
    %v60 = vld [vmem:[#allocation7 + $0x10] sm:$0xff]
    %v61 = vld [vmem:[#allocation7 + $0x18] sm:$0xff]
    %v62 = vld [vmem:[#allocation2] sm:$0xff]
    %v63 = vld [vmem:[#allocation3] sm:$0xff]
    %v64 = vld [vmem:[#allocation5] sm:$0xff]
    %vm65 = vcmask 261120
    %v67 = vsel %vm65, %v62, 0
    %69 = vmatpush.msra.mxu0 0.0
    %70 = vmatpush.msra.mxu0 0.0
    %71 = vmatpush.msra.mxu0 0.0
    %72 = vmatpush.msra.mxu0 0.0
    %73 = vmatpush.msra.mxu0 0.0
    %74 = vmatpush.msra.mxu0 0.0
    %75 = vmatpush.msra.mxu0 0.0
    %76 = vmatpush.msra.mxu0 0.0
    %77 = vmatpush.msra.mxu0 0.0
    %78 = vmatpush.msra.mxu0 0.0
    %79 = vmatpush.msra.mxu0 0.0
    %80 = vmatpush.msra.mxu0 0.0
    %81 = vmatpush.msra.mxu0 %v61
    %82 = vmatpush.msra.mxu0 %v60
    %83 = vmatpush.msra.mxu0 %v59
    %84 = vmatpush.msra.mxu0 %v58
    %85 = vmatmul.f32.gmra.mxu0 %v67
    %v86 = vpop.f32.mrf.mxu0
    %v87 = vadd.f32 0.0, %v86
    %88 = vdwg.mxu0
    %v89 = vadd.f32 %v64, %v87
    %v90 = vxor.u32 %v89, 2147483648
    %v91 = vmul.f32 %v90, 1.442695
    %v92 = vpow.pop %v91
    %v93 = vadd.f32 %v92, 1.0
    %v94 = vrcp.pop %v93
    %v95 = vmul.f32 %v93, %v94
    %v96 = vsub.f32 1.0, %v95
    %v97 = vmul.f32 %v94, %v96
    %v98 = vadd.f32 %v94, %v97
    %vm99 = vweird.f32 %v93
    %vm100 = vweird.f32 %v94
    %vm101 = vmor %vm99, %vm100
    %v102 = vsel %vm101, %v94, %v98
    %v103 = vand.u32 2147483647, %v93
    %vm104 = vcmp.eq.f32.partialorder %v103, 8.507059e+37
    %v105 = vand.u32 %v93, 2147483648
    %v106 = vor.u32 1.1754944e-38, %v105
    %v107 = vsel %vm104, %v106, %v102
    %v108 = vmul.f32 1.0, %v107
    %v109 = vmul.f32 %v108, 2.0
    %v110 = vsub.f32 %v109, 1.0
    %112 = vrot.lane.b32.xlu0 %v63, 32
    %v113 = vpop.permute.xlu0 %112
    %v115 = vmul.f32 %v108, %v113
    %117 = vrot.lane.b32.xlu0 %v110, 64
    %v118 = vpop.permute.xlu0 %117
    %v120 = vmul.f32 %v108, %v118
    %122 = vrot.lane.b32.xlu0 %v120, 32
    %v123 = vpop.permute.xlu0 %122
    %v125 = vadd.f32 %v115, %v123
    %v126 = vtanh.pop %v125
    %128 = vrot.lane.b32.xlu0 %v126, 64
    %v129 = vpop.permute.xlu0 %128
    %v131 = vmul.f32 %v108, %v129
    %s132 = scalar_lea.vmem [#allocation5], 8
    %v133 = vld [vmem:[%s132] sm:$0xff]
    %135 = vrot.lane.b32.xlu0 %v131, 32
    %v136 = vpop.permute.xlu0 %135
    %v137 = vsel %vm65, %v136, 0
    %139 = vmatpush.msra.mxu0 0.0
    %140 = vmatpush.msra.mxu0 0.0
    %141 = vmatpush.msra.mxu0 0.0
    %142 = vmatpush.msra.mxu0 0.0
    %143 = vmatpush.msra.mxu0 0.0
    %144 = vmatpush.msra.mxu0 0.0
    %145 = vmatpush.msra.mxu0 0.0
    %146 = vmatpush.msra.mxu0 0.0
    %147 = vmatpush.msra.mxu0 0.0
    %148 = vmatpush.msra.mxu0 0.0
    %149 = vmatpush.msra.mxu0 0.0
    %150 = vmatpush.msra.mxu0 0.0
    %151 = vmatpush.msra.mxu0 %v61
    %152 = vmatpush.msra.mxu0 %v60
    %153 = vmatpush.msra.mxu0 %v59
    %154 = vmatpush.msra.mxu0 %v58
    %155 = vmatmul.f32.gmra.mxu0 %v137
    %v156 = vpop.f32.mrf.mxu0
    %v157 = vadd.f32 0.0, %v156
    %158 = vdwg.mxu0
    %v159 = vadd.f32 %v133, %v157
    %v160 = vxor.u32 %v159, 2147483648
    %v161 = vmul.f32 %v160, 1.442695
    %v162 = vpow.pop %v161
    %v163 = vadd.f32 %v162, 1.0
    %v164 = vrcp.pop %v163
    %v165 = vmul.f32 %v163, %v164
    %v166 = vsub.f32 1.0, %v165
    %v167 = vmul.f32 %v164, %v166
    %v168 = vadd.f32 %v164, %v167
    %vm169 = vweird.f32 %v163
    %vm170 = vweird.f32 %v164
    %vm171 = vmor %vm169, %vm170
    %v172 = vsel %vm171, %v164, %v168
    %v173 = vand.u32 2147483647, %v163
    %vm174 = vcmp.eq.f32.partialorder %v173, 8.507059e+37
    %v175 = vand.u32 %v163, 2147483648
    %v176 = vor.u32 1.1754944e-38, %v175
    %v177 = vsel %vm174, %v176, %v172
    %v178 = vmul.f32 1.0, %v177
    %v179 = vmul.f32 %v178, 2.0
    %v180 = vsub.f32 %v179, 1.0
    %v181 = vmul.f32 %v178, %v125
    %183 = vrot.lane.b32.xlu0 %v180, 64
    %v184 = vpop.permute.xlu0 %183
    %v186 = vmul.f32 %v178, %v184
    %188 = vrot.lane.b32.xlu0 %v186, 32
    %v189 = vpop.permute.xlu0 %188
    %v191 = vadd.f32 %v181, %v189
    %v192 = vtanh.pop %v191
    %194 = vrot.lane.b32.xlu0 %v192, 64
    %v195 = vpop.permute.xlu0 %194
    %v197 = vmul.f32 %v178, %v195
    %s198 = scalar_lea.vmem [#allocation5], 16
    %v199 = vld [vmem:[%s198] sm:$0xff]
    %201 = vrot.lane.b32.xlu0 %v197, 32
    %v202 = vpop.permute.xlu0 %201
    %v203 = vsel %vm65, %v202, 0
    %205 = vmatpush.msra.mxu0 0.0
    %206 = vmatpush.msra.mxu0 0.0
    %207 = vmatpush.msra.mxu0 0.0
    %208 = vmatpush.msra.mxu0 0.0
    %209 = vmatpush.msra.mxu0 0.0
    %210 = vmatpush.msra.mxu0 0.0
    %211 = vmatpush.msra.mxu0 0.0
    %212 = vmatpush.msra.mxu0 0.0
    %213 = vmatpush.msra.mxu0 0.0
    %214 = vmatpush.msra.mxu0 0.0
    %215 = vmatpush.msra.mxu0 0.0
    %216 = vmatpush.msra.mxu0 0.0
    %217 = vmatpush.msra.mxu0 %v61
    %218 = vmatpush.msra.mxu0 %v60
    %219 = vmatpush.msra.mxu0 %v59
    %220 = vmatpush.msra.mxu0 %v58
    %221 = vmatmul.f32.gmra.mxu0 %v203
    %v222 = vpop.f32.mrf.mxu0
    %v223 = vadd.f32 0.0, %v222
    %224 = vdwg.mxu0
    %v225 = vadd.f32 %v199, %v223
    %v226 = vxor.u32 %v225, 2147483648
    %v227 = vmul.f32 %v226, 1.442695
    %v228 = vpow.pop %v227
    %v229 = vadd.f32 %v228, 1.0
    %v230 = vrcp.pop %v229
    %v231 = vmul.f32 %v229, %v230
    %v232 = vsub.f32 1.0, %v231
    %v233 = vmul.f32 %v230, %v232
    %v234 = vadd.f32 %v230, %v233
    %vm235 = vweird.f32 %v229
    %vm236 = vweird.f32 %v230
    %vm237 = vmor %vm235, %vm236
    %v238 = vsel %vm237, %v230, %v234
    %v239 = vand.u32 2147483647, %v229
    %vm240 = vcmp.eq.f32.partialorder %v239, 8.507059e+37
    %v241 = vand.u32 %v229, 2147483648
    %v242 = vor.u32 1.1754944e-38, %v241
    %v243 = vsel %vm240, %v242, %v238
    %v244 = vmul.f32 1.0, %v243
    %v245 = vmul.f32 %v244, 2.0
    %v246 = vsub.f32 %v245, 1.0
    %v247 = vmul.f32 %v244, %v191
    %249 = vrot.lane.b32.xlu0 %v246, 64
    %v250 = vpop.permute.xlu0 %249
    %v252 = vmul.f32 %v244, %v250
    %254 = vrot.lane.b32.xlu0 %v252, 32
    %v255 = vpop.permute.xlu0 %254
    %v257 = vadd.f32 %v247, %v255
    %v258 = vtanh.pop %v257
    %260 = vrot.lane.b32.xlu0 %v258, 64
    %v261 = vpop.permute.xlu0 %260
    %v263 = vmul.f32 %v244, %v261
    %s264 = scalar_lea.vmem [#allocation5], 24
    %v265 = vld [vmem:[%s264] sm:$0xff]
    %267 = vrot.lane.b32.xlu0 %v263, 32
    %v268 = vpop.permute.xlu0 %267
    %v269 = vsel %vm65, %v268, 0
    %271 = vmatpush.msra.mxu0 0.0
    %272 = vmatpush.msra.mxu0 0.0
    %273 = vmatpush.msra.mxu0 0.0
    %274 = vmatpush.msra.mxu0 0.0
    %275 = vmatpush.msra.mxu0 0.0
    %276 = vmatpush.msra.mxu0 0.0
    %277 = vmatpush.msra.mxu0 0.0
    %278 = vmatpush.msra.mxu0 0.0
    %279 = vmatpush.msra.mxu0 0.0
    %280 = vmatpush.msra.mxu0 0.0
    %281 = vmatpush.msra.mxu0 0.0
    %282 = vmatpush.msra.mxu0 0.0
    %283 = vmatpush.msra.mxu0 %v61
    %284 = vmatpush.msra.mxu0 %v60
    %285 = vmatpush.msra.mxu0 %v59
    %286 = vmatpush.msra.mxu0 %v58
    %287 = vmatmul.f32.gmra.mxu0 %v269
    %v288 = vpop.f32.mrf.mxu0
    %v289 = vadd.f32 0.0, %v288
    %290 = vdwg.mxu0
    %v291 = vadd.f32 %v265, %v289
    %v292 = vxor.u32 %v291, 2147483648
    %v293 = vmul.f32 %v292, 1.442695
    %v294 = vpow.pop %v293
    %v295 = vadd.f32 %v294, 1.0
    %v296 = vrcp.pop %v295
    %v297 = vmul.f32 %v295, %v296
    %v298 = vsub.f32 1.0, %v297
    %v299 = vmul.f32 %v296, %v298
    %v300 = vadd.f32 %v296, %v299
    %vm301 = vweird.f32 %v295
    %vm302 = vweird.f32 %v296
    %vm303 = vmor %vm301, %vm302
    %v304 = vsel %vm303, %v296, %v300
    %v305 = vand.u32 2147483647, %v295
    %vm306 = vcmp.eq.f32.partialorder %v305, 8.507059e+37
    %v307 = vand.u32 %v295, 2147483648
    %v308 = vor.u32 1.1754944e-38, %v307
    %v309 = vsel %vm306, %v308, %v304
    %v310 = vmul.f32 1.0, %v309
    %v311 = vmul.f32 %v310, 2.0
    %v312 = vsub.f32 %v311, 1.0
    %v313 = vmul.f32 %v310, %v257
    %315 = vrot.lane.b32.xlu0 %v312, 64
    %v316 = vpop.permute.xlu0 %315
    %v318 = vmul.f32 %v310, %v316
    %320 = vrot.lane.b32.xlu0 %v318, 32
    %v321 = vpop.permute.xlu0 %320
    %v323 = vadd.f32 %v313, %v321
    %v324 = vtanh.pop %v323
    %326 = vrot.lane.b32.xlu0 %v324, 64
    %v327 = vpop.permute.xlu0 %326
    %v329 = vmul.f32 %v310, %v327
    %s330 = scalar_lea.vmem [#allocation5], 32
    %v331 = vld [vmem:[%s330] sm:$0xff]
    %333 = vrot.lane.b32.xlu0 %v329, 32
    %v334 = vpop.permute.xlu0 %333
    %v335 = vsel %vm65, %v334, 0
    %337 = vmatpush.msra.mxu0 0.0
    %338 = vmatpush.msra.mxu0 0.0
    %339 = vmatpush.msra.mxu0 0.0
    %340 = vmatpush.msra.mxu0 0.0
    %341 = vmatpush.msra.mxu0 0.0
    %342 = vmatpush.msra.mxu0 0.0
    %343 = vmatpush.msra.mxu0 0.0
    %344 = vmatpush.msra.mxu0 0.0
    %345 = vmatpush.msra.mxu0 0.0
    %346 = vmatpush.msra.mxu0 0.0
    %347 = vmatpush.msra.mxu0 0.0
    %348 = vmatpush.msra.mxu0 0.0
    %349 = vmatpush.msra.mxu0 %v61
    %350 = vmatpush.msra.mxu0 %v60
    %351 = vmatpush.msra.mxu0 %v59
    %352 = vmatpush.msra.mxu0 %v58
    %353 = vmatmul.f32.gmra.mxu0 %v335
    %v354 = vpop.f32.mrf.mxu0
    %v355 = vadd.f32 0.0, %v354
    %356 = vdwg.mxu0
    %v357 = vadd.f32 %v331, %v355
    %v358 = vxor.u32 %v357, 2147483648
    %v359 = vmul.f32 %v358, 1.442695
    %v360 = vpow.pop %v359
    %v361 = vadd.f32 %v360, 1.0
    %v362 = vrcp.pop %v361
    %v363 = vmul.f32 %v361, %v362
    %v364 = vsub.f32 1.0, %v363
    %v365 = vmul.f32 %v362, %v364
    %v366 = vadd.f32 %v362, %v365
    %vm367 = vweird.f32 %v361
    %vm368 = vweird.f32 %v362
    %vm369 = vmor %vm367, %vm368
    %v370 = vsel %vm369, %v362, %v366
    %v371 = vand.u32 2147483647, %v361
    %vm372 = vcmp.eq.f32.partialorder %v371, 8.507059e+37
    %v373 = vand.u32 %v361, 2147483648
    %v374 = vor.u32 1.1754944e-38, %v373
    %v375 = vsel %vm372, %v374, %v370
    %v376 = vmul.f32 1.0, %v375
    %v377 = vmul.f32 %v376, 2.0
    %v378 = vsub.f32 %v377, 1.0
    %v379 = vmul.f32 %v376, %v323
    %381 = vrot.lane.b32.xlu0 %v378, 64
    %v382 = vpop.permute.xlu0 %381
    %v384 = vmul.f32 %v376, %v382
    %386 = vrot.lane.b32.xlu0 %v384, 32
    %v387 = vpop.permute.xlu0 %386
    %v389 = vadd.f32 %v379, %v387
    %v390 = vtanh.pop %v389
    %392 = vrot.lane.b32.xlu0 %v390, 64
    %v393 = vpop.permute.xlu0 %392
    %v395 = vmul.f32 %v376, %v393
    %s396 = scalar_lea.vmem [#allocation5], 40
    %v397 = vld [vmem:[%s396] sm:$0xff]
    %399 = vrot.lane.b32.xlu0 %v395, 32
    %v400 = vpop.permute.xlu0 %399
    %v401 = vsel %vm65, %v400, 0
    %403 = vmatpush.msra.mxu0 0.0
    %404 = vmatpush.msra.mxu0 0.0
    %405 = vmatpush.msra.mxu0 0.0
    %406 = vmatpush.msra.mxu0 0.0
    %407 = vmatpush.msra.mxu0 0.0
    %408 = vmatpush.msra.mxu0 0.0
    %409 = vmatpush.msra.mxu0 0.0
    %410 = vmatpush.msra.mxu0 0.0
    %411 = vmatpush.msra.mxu0 0.0
    %412 = vmatpush.msra.mxu0 0.0
    %413 = vmatpush.msra.mxu0 0.0
    %414 = vmatpush.msra.mxu0 0.0
    %415 = vmatpush.msra.mxu0 %v61
    %416 = vmatpush.msra.mxu0 %v60
    %417 = vmatpush.msra.mxu0 %v59
    %418 = vmatpush.msra.mxu0 %v58
    %419 = vmatmul.f32.gmra.mxu0 %v401
    %v420 = vpop.f32.mrf.mxu0
    %v421 = vadd.f32 0.0, %v420
    %422 = vdwg.mxu0
    %v423 = vadd.f32 %v397, %v421
    %v424 = vxor.u32 %v423, 2147483648
    %v425 = vmul.f32 %v424, 1.442695
    %v426 = vpow.pop %v425
    %v427 = vadd.f32 %v426, 1.0
    %v428 = vrcp.pop %v427
    %v429 = vmul.f32 %v427, %v428
    %v430 = vsub.f32 1.0, %v429
    %v431 = vmul.f32 %v428, %v430
    %v432 = vadd.f32 %v428, %v431
    %vm433 = vweird.f32 %v427
    %vm434 = vweird.f32 %v428
    %vm435 = vmor %vm433, %vm434
    %v436 = vsel %vm435, %v428, %v432
    %v437 = vand.u32 2147483647, %v427
    %vm438 = vcmp.eq.f32.partialorder %v437, 8.507059e+37
    %v439 = vand.u32 %v427, 2147483648
    %v440 = vor.u32 1.1754944e-38, %v439
    %v441 = vsel %vm438, %v440, %v436
    %v442 = vmul.f32 1.0, %v441
    %v443 = vmul.f32 %v442, 2.0
    %v444 = vsub.f32 %v443, 1.0
    %v445 = vmul.f32 %v442, %v389
    %447 = vrot.lane.b32.xlu0 %v444, 64
    %v448 = vpop.permute.xlu0 %447
    %v450 = vmul.f32 %v442, %v448
    %452 = vrot.lane.b32.xlu0 %v450, 32
    %v453 = vpop.permute.xlu0 %452
    %v455 = vadd.f32 %v445, %v453
    %v456 = vtanh.pop %v455
    %458 = vrot.lane.b32.xlu0 %v456, 64
    %v459 = vpop.permute.xlu0 %458
    %v461 = vmul.f32 %v442, %v459
    %s462 = scalar_lea.vmem [#allocation5], 48
    %v463 = vld [vmem:[%s462] sm:$0xff]
    %465 = vrot.lane.b32.xlu0 %v461, 32
    %v466 = vpop.permute.xlu0 %465
    %v467 = vsel %vm65, %v466, 0
    %469 = vmatpush.msra.mxu0 0.0
    %470 = vmatpush.msra.mxu0 0.0
    %471 = vmatpush.msra.mxu0 0.0
    %472 = vmatpush.msra.mxu0 0.0
    %473 = vmatpush.msra.mxu0 0.0
    %474 = vmatpush.msra.mxu0 0.0
    %475 = vmatpush.msra.mxu0 0.0
    %476 = vmatpush.msra.mxu0 0.0
    %477 = vmatpush.msra.mxu0 0.0
    %478 = vmatpush.msra.mxu0 0.0
    %479 = vmatpush.msra.mxu0 0.0
    %480 = vmatpush.msra.mxu0 0.0
    %481 = vmatpush.msra.mxu0 %v61
    %482 = vmatpush.msra.mxu0 %v60
    %483 = vmatpush.msra.mxu0 %v59
    %484 = vmatpush.msra.mxu0 %v58
    %485 = vmatmul.f32.gmra.mxu0 %v467
    %v486 = vpop.f32.mrf.mxu0
    %v487 = vadd.f32 0.0, %v486
    %488 = vdwg.mxu0
    %v489 = vadd.f32 %v463, %v487
    %v490 = vxor.u32 %v489, 2147483648
    %v491 = vmul.f32 %v490, 1.442695
    %v492 = vpow.pop %v491
    %v493 = vadd.f32 %v492, 1.0
    %v494 = vrcp.pop %v493
    %v495 = vmul.f32 %v493, %v494
    %v496 = vsub.f32 1.0, %v495
    %v497 = vmul.f32 %v494, %v496
    %v498 = vadd.f32 %v494, %v497
    %vm499 = vweird.f32 %v493
    %vm500 = vweird.f32 %v494
    %vm501 = vmor %vm499, %vm500
    %v502 = vsel %vm501, %v494, %v498
    %v503 = vand.u32 2147483647, %v493
    %vm504 = vcmp.eq.f32.partialorder %v503, 8.507059e+37
    %v505 = vand.u32 %v493, 2147483648
    %v506 = vor.u32 1.1754944e-38, %v505
    %v507 = vsel %vm504, %v506, %v502
    %v508 = vmul.f32 1.0, %v507
    %v509 = vmul.f32 %v508, 2.0
    %v510 = vsub.f32 %v509, 1.0
    %v511 = vmul.f32 %v508, %v455
    %513 = vrot.lane.b32.xlu0 %v510, 64
    %v514 = vpop.permute.xlu0 %513
    %v516 = vmul.f32 %v508, %v514
    %518 = vrot.lane.b32.xlu0 %v516, 32
    %v519 = vpop.permute.xlu0 %518
    %v521 = vadd.f32 %v511, %v519
    %v522 = vtanh.pop %v521
    %524 = vrot.lane.b32.xlu0 %v522, 64
    %v525 = vpop.permute.xlu0 %524
    %v527 = vmul.f32 %v508, %v525
    %s528 = scalar_lea.vmem [#allocation5], 56
    %v529 = vld [vmem:[%s528] sm:$0xff]
    %531 = vrot.lane.b32.xlu0 %v527, 32
    %v532 = vpop.permute.xlu0 %531
    %v533 = vsel %vm65, %v532, 0
    %535 = vmatpush.msra.mxu0 0.0
    %536 = vmatpush.msra.mxu0 0.0
    %537 = vmatpush.msra.mxu0 0.0
    %538 = vmatpush.msra.mxu0 0.0
    %539 = vmatpush.msra.mxu0 0.0
    %540 = vmatpush.msra.mxu0 0.0
    %541 = vmatpush.msra.mxu0 0.0
    %542 = vmatpush.msra.mxu0 0.0
    %543 = vmatpush.msra.mxu0 0.0
    %544 = vmatpush.msra.mxu0 0.0
    %545 = vmatpush.msra.mxu0 0.0
    %546 = vmatpush.msra.mxu0 0.0
    %547 = vmatpush.msra.mxu0 %v61
    %548 = vmatpush.msra.mxu0 %v60
    %549 = vmatpush.msra.mxu0 %v59
    %550 = vmatpush.msra.mxu0 %v58
    %551 = vmatmul.f32.gmra.mxu0 %v533
    %v552 = vpop.f32.mrf.mxu0
    %v553 = vadd.f32 0.0, %v552
    %554 = vdwg.mxu0
    %v555 = vadd.f32 %v529, %v553
    %v556 = vxor.u32 %v555, 2147483648
    %v557 = vmul.f32 %v556, 1.442695
    %v558 = vpow.pop %v557
    %v559 = vadd.f32 %v558, 1.0
    %v560 = vrcp.pop %v559
    %v561 = vmul.f32 %v559, %v560
    %v562 = vsub.f32 1.0, %v561
    %v563 = vmul.f32 %v560, %v562
    %v564 = vadd.f32 %v560, %v563
    %vm565 = vweird.f32 %v559
    %vm566 = vweird.f32 %v560
    %vm567 = vmor %vm565, %vm566
    %v568 = vsel %vm567, %v560, %v564
    %v569 = vand.u32 2147483647, %v559
    %vm570 = vcmp.eq.f32.partialorder %v569, 8.507059e+37
    %v571 = vand.u32 %v559, 2147483648
    %v572 = vor.u32 1.1754944e-38, %v571
    %v573 = vsel %vm570, %v572, %v568
    %v574 = vmul.f32 1.0, %v573
    %v575 = vmul.f32 %v574, 2.0
    %v576 = vsub.f32 %v575, 1.0
    %v577 = vmul.f32 %v574, %v521
    %579 = vrot.lane.b32.xlu0 %v576, 64
    %v580 = vpop.permute.xlu0 %579
    %v582 = vmul.f32 %v574, %v580
    %584 = vrot.lane.b32.xlu0 %v582, 32
    %v585 = vpop.permute.xlu0 %584
    %v587 = vadd.f32 %v577, %v585
    %v588 = vtanh.pop %v587
    %590 = vrot.lane.b32.xlu0 %v588, 64
    %v591 = vpop.permute.xlu0 %590
    %v593 = vmul.f32 %v574, %v591
    %595 = vrot.lane.b32.xlu0 %v593, 32
    %v596 = vpop.permute.xlu0 %595
    %598 = vst.msk [vmem:[#allocation2] sm:$0xff] %vm65, %v596
    %600 = vrot.lane.b32.xlu0 %v587, 96
    %v601 = vpop.permute.xlu0 %600
    %603 = vst.msk [vmem:[#allocation3] sm:$0xff] %vm65, %v601
    // Predicated region
    $region30: #{tpu_custom_call.1} parent=1 // pred_check
      %p604 = pneg %p51
    $region31: #{tpu_custom_call.1} parent=1 // pred_check_branch
      %606 = sbr.rel (%p604) target = $region33
    $region32: #{tpu_custom_call.1} parent=1 // pred_region
      %v607 = vld [vmem:[%s2] sm:$0x1]
      %v609 = vperm.slane %v607, 0
      %610 = vrot.lane.b32.xlu0 %v609, 96
      %v611 = vpop.permute.xlu0 %610
      %v613 = vmul.f32 %v593, %v611
      %615 = vrot.lane.b32.xlu0 %v613, 32
      %v616 = vpop.permute.xlu0 %615
      %v618 = vsel %vm65, %v616, 0.0
      %619 = vadd.xlane.f32.xlu0 %v618
      %v620 = vpop.xlane.xlu0 %619
      %v621 = vld [vmem:[#allocation4] sm:$0x1]
      %v623 = vperm.slane %v621, 0
      %v625 = vadd.f32 %v620, %v623
      %vm626 = vcmask 7168
      %627 = vst.msk [vmem:[%s4] sm:$0xff] %vm626, %v625
    $region33: #{tpu_custom_call.1} parent=1 // pred_fallthru
      _
    // Predicated region
    $region34: #{tpu_custom_call.1} parent=1 // pred_check
      _
    $region35: #{tpu_custom_call.1} parent=1 // pred_check_branch
      %629 = sbr.rel (0) target = $region37
    $region36: #{tpu_custom_call.1} parent=1 // pred_region
      _
    $region37: #{tpu_custom_call.1} parent=1 // pred_fallthru
      _
    // Predicated region
    $region38: #{tpu_custom_call.1} parent=1 // pred_check
      _
    $region39: #{tpu_custom_call.1} parent=1 // pred_check_branch
      %631 = sbr.rel (0) target = $region41
    $region40: #{tpu_custom_call.1} parent=1 // pred_region
      _
    $region41: #{tpu_custom_call.1} parent=1 // pred_fallthru
      _
    %632 = vsyncpa [#allocation6], 1
    %633 = vsyncpa [#allocation8], 1

</llo_original>
